<compile_context>
chip_gen: v5e
topology: v5e:2x2
jax: 0.10.0
libtpu: 0.0.40
codegen_flags: <defaults>
</compile_context>

<pallas_src>
import functools

import jax
import jax.numpy as jnp
from jax.experimental import pallas as pl
from jax.experimental.pallas import tpu as pltpu


def _focal_loss_tile_kernel(n_ref, pred_ref, tgt_ref, alphat_ref, out_ref, *,
                            gamma: float, smooth_eps: float, class_axis: int):
    # Block layouts:
    #   class_axis == 0 (small C):  pred (C, T), tgt/alpha_t (1, T)
    #   class_axis == 1 (large C):  pred (T, C), tgt/alpha_t (T, 1)
    pred = pred_ref[...].astype(jnp.float32)
    tgt = tgt_ref[...]                                   # int32
    alpha_t = alphat_ref[...]                            # f32, alpha[target]

    ca = class_axis
    sa = 1 - ca
    c = pred.shape[ca]
    tb = pred.shape[sa]

    # Stable softmax pieces; log_softmax itself is never materialized.
    row_max = jnp.max(pred, axis=ca, keepdims=True)
    e = jnp.exp(pred - row_max)
    sum_e = jnp.sum(e, axis=ca, keepdims=True)
    lse = jnp.log(sum_e)
    m_lse = row_max + lse                                # reused (logpt & smooth)

    # Target-class gather via select (no bool->f32 convert + multiply).
    cls_idx = jax.lax.broadcasted_iota(jnp.int32, pred.shape, ca)
    sel = cls_idx == tgt
    pred_tgt = jnp.sum(jnp.where(sel, pred, 0.0), axis=ca, keepdims=True)
    e_tgt = jnp.sum(jnp.where(sel, e, 0.0), axis=ca, keepdims=True)

    ce_loss = m_lse - pred_tgt                           # = -logpt
    pt = e_tgt / sum_e                                   # = exp(logpt), no 2nd exp

    # (1 - pt) ** gamma: multiply chain for small integer gamma (default 2).
    om = 1.0 - pt
    g = float(gamma)
    if g == int(g) and 0 <= int(g) <= 8:
        gi = int(g)
        mod = jnp.ones_like(om) if gi == 0 else om
        for _ in range(max(0, gi - 1)):
            mod = mod * om
    else:
        mod = om ** g

    focal = alpha_t * mod * ce_loss
    # smooth_loss = -mean(log_softmax, classes) = row_max + lse - mean(pred)
    smooth = m_lse - jnp.sum(pred, axis=ca, keepdims=True) * jnp.float32(1.0 / c)
    loss = (1.0 - smooth_eps) * focal + smooth_eps * smooth   # (1,T)/(T,1)

    # Ragged-tail mask: the last block may overhang N (no wrapper padding);
    # OOB lanes hold unspecified data and are zeroed by this select.  All
    # reductions above are class-axis only, so garbage never crosses samples.
    row0 = pl.program_id(0) * tb
    ridx = row0 + jax.lax.broadcasted_iota(jnp.int32, loss.shape, sa)
    loss = jnp.where(ridx < n_ref[0, 0], loss, 0.0)

    out_ref[0, 0] = jnp.sum(loss)                             # partial sum


def multi_class_focal_loss(pred, target, alpha, *, gamma=2.0, smooth_eps=0.1,
                           reduction="mean", tile_n=None):
    """pred: (N, C) logits (any float dtype), target: (N,) ints, alpha: (C,)."""
    assert pred.ndim == 2
    n, c = pred.shape
    target = target.reshape(n).astype(jnp.int32)
    alpha = jnp.asarray(alpha, dtype=jnp.float32).reshape(c)
    # Gather alpha[target] once in the wrapper (tiny, fuses in XLA) so the
    # kernel never does the full-block alpha*one_hot multiply + reduce.
    alpha_t = alpha[target].astype(jnp.float32)

    # Small C: put samples on the 128-wide lane axis, classes on sublanes.
    transposed = c < 128
    gran = 128 if transposed else 8
    itemsize = jnp.dtype(pred.dtype).itemsize

    # Generation-aware VMEM budget (64 MiB/TC on v7x, 128 MiB on v5e/v6e).
    try:
        vmem_cap = int(pltpu.get_tpu_info().vmem_capacity_bytes)
    except Exception:
        vmem_cap = 0
    if vmem_cap <= 0:
        vmem_cap = 64 * 1024 * 1024          # v7x-safe fallback
    vmem_limit = (vmem_cap * 3) // 4

    if tile_n is None:
        # Size blocks from the in-kernel working set: double-buffered input
        # (2 * itemsize) plus ~4 live f32 full-block temporaries, budgeted to
        # ~half of physical VMEM.  No artificial 2 MiB / 2048-row caps.
        bytes_per_elem = 2 * itemsize + 16
        t = (vmem_cap // 2) // max(1, c * bytes_per_elem)
    else:
        t = int(tile_n)
    t = max(gran, (t // gran) * gran)

    if t >= n:
        t = n                                # single block covers all rows
    elif tile_n is None:
        # Megacore (v7x): keep >= 4 grid steps so the "parallel" axis can be
        # split across both TensorCores, as long as blocks stay >~2 MiB.
        while ((n + t - 1) // t) < 4 and t * c * itemsize > (2 << 20):
            new_t = max(gran, ((t // 2) // gran) * gran)
            if new_t == t:
                break
            t = new_t
    num_tiles = (n + t - 1) // t             # no padding: kernel masks the tail
    # TODO(synk): extremely large C (a single gran-row block exceeding the VMEM
    # budget) would need a class-axis grid with online logsumexp.

    if transposed:
        # (C, N): samples on lanes.  NOTE: the transpose is one extra HBM pass
        # when pred is already materialized as (N, C); when this function is
        # jitted together with the producer of pred, XLA can absorb it into
        # the producer's output layout.
        pred_in = pred.T
        tgt_in = target.reshape(1, n)
        alphat_in = alpha_t.reshape(1, n)
        pred_spec = pl.BlockSpec((c, t), lambda i: (0, i))
        vec_spec = pl.BlockSpec((1, t), lambda i: (0, i))
        class_axis = 0
    else:
        pred_in = pred                       # (N, C): classes on lanes
        tgt_in = target.reshape(n, 1)
        alphat_in = alpha_t.reshape(n, 1)
        pred_spec = pl.BlockSpec((t, c), lambda i: (i, 0))
        vec_spec = pl.BlockSpec((t, 1), lambda i: (i, 0))
        class_axis = 1

    # N as an SMEM scalar: the tail mask does not force a recompile per batch
    # size (shapes/grid may still, but the mask itself is runtime data).
    n_arr = jnp.full((1, 1), n, dtype=jnp.int32)

    kernel = functools.partial(
        _focal_loss_tile_kernel, gamma=float(gamma),
        smooth_eps=float(smooth_eps), class_axis=class_axis)

    partials = pl.pallas_call(
        kernel,
        out_shape=jax.ShapeDtypeStruct((num_tiles, 1), jnp.float32),
        grid=(num_tiles,),
        in_specs=[pl.BlockSpec(memory_space=pltpu.MemorySpace.SMEM),
                  pred_spec, vec_spec, vec_spec],
        out_specs=pl.BlockSpec((1, 1), lambda i: (i, 0),
                               memory_space=pltpu.MemorySpace.SMEM),
        compiler_params=pltpu.CompilerParams(
            dimension_semantics=("parallel",),
            vmem_limit_bytes=int(vmem_limit)),
    )(n_arr, pred_in, tgt_in, alphat_in)

    total = jnp.sum(partials)
    if reduction == "mean":
        return total / jnp.float32(n)
    elif reduction == "sum":
        return total
    # TODO(synk): reduction='none' needs a per-sample output; not implemented.
    raise NotImplementedError("reduction must be 'mean' or 'sum'")


def _reference(pred, target, alpha, gamma=2.0, smooth_eps=0.1):
    # Pure-JAX reference for sanity checking.
    log_softmax = jax.nn.log_softmax(pred.astype(jnp.float32), axis=1)
    logpt = jnp.take_along_axis(log_softmax, target[:, None], axis=1)[:, 0]
    ce = -logpt
    pt = jnp.exp(logpt)
    a = alpha[target]
    focal = a * (1.0 - pt) ** gamma * ce
    smooth = -log_softmax.mean(axis=-1)
    focal = (1.0 - smooth_eps) * focal + smooth_eps * smooth
    return jnp.mean(focal)


if __name__ == "__main__":
    key = jax.random.PRNGKey(0)
    k1, k2, k3, k4, k5, k6 = jax.random.split(key, 6)

    # Case 1: module-default class count (alpha list of length 7), small N,
    # single block, samples-on-lanes layout.
    C = 7
    alpha = jnp.ones((C,), dtype=jnp.float32)   # deterministic module params
    N = 16
    pred = jax.random.normal(k1, (N, C), dtype=jnp.float32)
    target = jax.random.randint(k2, (N,), 0, C, dtype=jnp.int32)
    loss = multi_class_focal_loss(pred, target, alpha, gamma=2.0,
                                  smooth_eps=0.1, reduction="mean")
    loss = jax.block_until_ready(loss)
    ref = _reference(pred, target, alpha)
    assert jnp.allclose(loss, ref, atol=1e-5, rtol=1e-5), (loss, ref)

    # Case 2: multi-tile samples-on-lanes path with an unpadded ragged tail.
    N2 = 300
    pred2 = jax.random.normal(k3, (N2, C), dtype=jnp.float32)
    target2 = jax.random.randint(k4, (N2,), 0, C, dtype=jnp.int32)
    loss2 = multi_class_focal_loss(pred2, target2, alpha, gamma=2.0,
                                   smooth_eps=0.1, reduction="mean",
                                   tile_n=128)
    loss2 = jax.block_until_ready(loss2)
    ref2 = _reference(pred2, target2, alpha)
    assert jnp.allclose(loss2, ref2, atol=1e-5, rtol=1e-5), (loss2, ref2)

    # Case 3: large class count (classes-on-lanes path) with a ragged tail
    # and non-uniform alpha.
    C3, N3 = 160, 80
    alpha3 = jax.random.uniform(k5, (C3,), minval=0.5, maxval=1.5,
                                dtype=jnp.float32)
    pred3 = jax.random.normal(k6, (N3, C3), dtype=jnp.float32)
    target3 = jax.random.randint(k2, (N3,), 0, C3, dtype=jnp.int32)
    loss3 = multi_class_focal_loss(pred3, target3, alpha3, gamma=2.0,
                                   smooth_eps=0.1, reduction="mean",
                                   tile_n=32)
    loss3 = jax.block_until_ready(loss3)
    ref3 = _reference(pred3, target3, alpha3)
    assert jnp.allclose(loss3, ref3, atol=1e-5, rtol=1e-5), (loss3, ref3)

    print("KERNEL_OK")
</pallas_src>

<mosaic_0001>
module attributes {stable_mosaic.version = 11 : i64} {
  func.func @_focal_loss_tile_kernel(%arg0: i32, %arg1: memref<1x1xi32, #tpu.memory_space<smem>>, %arg2: memref<7x16xf32, #tpu.memory_space<vmem>>, %arg3: memref<1x16xi32, #tpu.memory_space<vmem>>, %arg4: memref<1x16xf32, #tpu.memory_space<vmem>>, %arg5: memref<1x1xf32, #tpu.memory_space<smem>>) attributes {dimension_semantics = [#tpu.dimension_semantics<parallel>], iteration_bounds = array<i64: 1>, scalar_prefetch = 0 : i64, scratch_operands = 0 : i64, tpu.core_type = #tpu.core_type<tc>, window_params = [{transform_indices = @transform_0, window_bounds = array<i64: 1, 1>}, {transform_indices = @transform_1, window_bounds = array<i64: 7, 16>}, {transform_indices = @transform_2, window_bounds = array<i64: 1, 16>}, {transform_indices = @transform_3, window_bounds = array<i64: 1, 16>}, {transform_indices = @transform_4, window_bounds = array<i64: 1, 1>}]} {
    %c0 = arith.constant 0 : index
    %c0_0 = arith.constant 0 : index
    %0 = vector.load %arg2[%c0, %c0_0] : memref<7x16xf32, #tpu.memory_space<vmem>>, vector<7x16xf32>
    %c0_1 = arith.constant 0 : index
    %c0_2 = arith.constant 0 : index
    %1 = vector.load %arg3[%c0_1, %c0_2] : memref<1x16xi32, #tpu.memory_space<vmem>>, vector<1x16xi32>
    %c0_3 = arith.constant 0 : index
    %c0_4 = arith.constant 0 : index
    %2 = vector.load %arg4[%c0_3, %c0_4] : memref<1x16xf32, #tpu.memory_space<vmem>>, vector<1x16xf32>
    %cst = arith.constant dense<0xFF800000> : vector<16xf32>
    %3 = vector.multi_reduction <maximumf>, %0, %cst [0] : vector<7x16xf32> to vector<16xf32>
    %4 = vector.shape_cast %3 : vector<16xf32> to vector<1x16xf32>
    %5 = vector.broadcast %4 : vector<1x16xf32> to vector<7x16xf32>
    %6 = arith.subf %0, %5 : vector<7x16xf32>
    %7 = math.exp %6 : vector<7x16xf32>
    %cst_5 = arith.constant dense<0.000000e+00> : vector<16xf32>
    %8 = vector.multi_reduction <add>, %7, %cst_5 [0] : vector<7x16xf32> to vector<16xf32>
    %9 = vector.shape_cast %8 : vector<16xf32> to vector<1x16xf32>
    %10 = math.log %9 : vector<1x16xf32>
    %11 = arith.addf %4, %10 : vector<1x16xf32>
    %12 = tpu.iota {dimensions = array<i32: 0>} : vector<7x16xi32>
    %13 = vector.broadcast %1 : vector<1x16xi32> to vector<7x16xi32>
    %14 = arith.cmpi eq, %12, %13 : vector<7x16xi32>
    %cst_6 = arith.constant 0.000000e+00 : f32
    %15 = vector.broadcast %cst_6 : f32 to vector<7x16xf32>
    %16 = arith.select %14, %0, %15 : vector<7x16xi1>, vector<7x16xf32>
    %cst_7 = arith.constant dense<0.000000e+00> : vector<16xf32>
    %17 = vector.multi_reduction <add>, %16, %cst_7 [0] : vector<7x16xf32> to vector<16xf32>
    %18 = vector.shape_cast %17 : vector<16xf32> to vector<1x16xf32>
    %cst_8 = arith.constant 0.000000e+00 : f32
    %19 = vector.broadcast %cst_8 : f32 to vector<7x16xf32>
    %20 = arith.select %14, %7, %19 : vector<7x16xi1>, vector<7x16xf32>
    %cst_9 = arith.constant dense<0.000000e+00> : vector<16xf32>
    %21 = vector.multi_reduction <add>, %20, %cst_9 [0] : vector<7x16xf32> to vector<16xf32>
    %22 = vector.shape_cast %21 : vector<16xf32> to vector<1x16xf32>
    %23 = arith.subf %11, %18 : vector<1x16xf32>
    %24 = arith.divf %22, %9 : vector<1x16xf32>
    %cst_10 = arith.constant 1.000000e+00 : f32
    %25 = vector.broadcast %cst_10 : f32 to vector<1x16xf32>
    %26 = arith.subf %25, %24 : vector<1x16xf32>
    %27 = arith.mulf %26, %26 : vector<1x16xf32>
    %28 = arith.mulf %2, %27 : vector<1x16xf32>
    %29 = arith.mulf %28, %23 : vector<1x16xf32>
    %cst_11 = arith.constant dense<0.000000e+00> : vector<16xf32>
    %30 = vector.multi_reduction <add>, %0, %cst_11 [0] : vector<7x16xf32> to vector<16xf32>
    %31 = vector.shape_cast %30 : vector<16xf32> to vector<1x16xf32>
    %cst_12 = arith.constant 0.142857149 : f32
    %32 = vector.broadcast %cst_12 : f32 to vector<1x16xf32>
    %33 = arith.mulf %31, %32 : vector<1x16xf32>
    %34 = arith.subf %11, %33 : vector<1x16xf32>
    %cst_13 = arith.constant 0.899999976 : f32
    %35 = vector.broadcast %cst_13 : f32 to vector<1x16xf32>
    %36 = arith.mulf %35, %29 : vector<1x16xf32>
    %cst_14 = arith.constant 1.000000e-01 : f32
    %37 = vector.broadcast %cst_14 : f32 to vector<1x16xf32>
    %38 = arith.mulf %37, %34 : vector<1x16xf32>
    %39 = arith.addf %36, %38 : vector<1x16xf32>
    %c16_i32 = arith.constant 16 : i32
    %40 = arith.muli %arg0, %c16_i32 : i32
    %41 = tpu.iota {dimensions = array<i32: 1>} : vector<1x16xi32>
    %42 = vector.broadcast %40 : i32 to vector<1x16xi32>
    %43 = arith.addi %42, %41 : vector<1x16xi32>
    %c0_15 = arith.constant 0 : index
    %c0_16 = arith.constant 0 : index
    %44 = memref.load %arg1[%c0_15, %c0_16] : memref<1x1xi32, #tpu.memory_space<smem>>
    %45 = vector.broadcast %44 : i32 to vector<1x16xi32>
    %46 = arith.cmpi slt, %43, %45 : vector<1x16xi32>
    %cst_17 = arith.constant 0.000000e+00 : f32
    %47 = vector.broadcast %cst_17 : f32 to vector<1x16xf32>
    %48 = arith.select %46, %39, %47 : vector<1x16xi1>, vector<1x16xf32>
    %49 = vector.shape_cast %48 : vector<1x16xf32> to vector<1x1x16xf32>
    %cst_18 = arith.constant dense<0.000000e+00> : vector<1xf32>
    %50 = vector.multi_reduction <add>, %49, %cst_18 [1, 2] : vector<1x1x16xf32> to vector<1xf32>
    %51 = vector.shape_cast %50 : vector<1xf32> to vector<1x1x1xf32>
    %52 = vector.extract %51[0, 0, 0] : f32 from vector<1x1x1xf32>
    %c0_19 = arith.constant 0 : index
    %c0_20 = arith.constant 0 : index
    %53 = memref.load %arg5[%c0_19, %c0_20] : memref<1x1xf32, #tpu.memory_space<smem>>
    memref.store %52, %arg5[%c0_19, %c0_20] : memref<1x1xf32, #tpu.memory_space<smem>>
    return
  }
  func.func @transform_0(%arg0: i32) -> (i32, i32) {
    %c0_i32 = arith.constant 0 : i32
    %c0_i32_0 = arith.constant 0 : i32
    %c0_i32_1 = arith.constant 0 : i32
    return %c0_i32, %c0_i32_0 : i32, i32
  }
  func.func @transform_1(%arg0: i32) -> (i32, i32) {
    %c0_i32 = arith.constant 0 : i32
    %c0_i32_0 = arith.constant 0 : i32
    return %c0_i32, %arg0 : i32, i32
  }
  func.func @transform_2(%arg0: i32) -> (i32, i32) {
    %c0_i32 = arith.constant 0 : i32
    %c0_i32_0 = arith.constant 0 : i32
    return %c0_i32, %arg0 : i32, i32
  }
  func.func @transform_3(%arg0: i32) -> (i32, i32) {
    %c0_i32 = arith.constant 0 : i32
    %c0_i32_0 = arith.constant 0 : i32
    return %c0_i32, %arg0 : i32, i32
  }
  func.func @transform_4(%arg0: i32) -> (i32, i32) {
    %c0_i32 = arith.constant 0 : i32
    %c0_i32_0 = arith.constant 0 : i32
    return %arg0, %c0_i32 : i32, i32
  }
}

</mosaic_0001>

<llo_original>
// kernel: tpu_custom_call.1
$region0: #{tpu_custom_call.1}
  #allocation0 [shape = 'u32[]', space=smem, size = 0x4, offset = 0x4, fixed_abs, tag = 'smem constant byte address 0x4 - core index']
  #allocation1 [shape = 'u32[72,128]{1,0:T(1,128)}', space=vmem, size = 0x9000, scoped, tag = 'internal scratch']
  #allocation2 [shape = 's32[1,1]{1,0:T(1,128)S(6)}', space=smem, size = 0x200, scoped, tag = 'scoped memory for tpu_custom_call.1']
  %s0 = inlined_call_operand.<no memory space> [shape: s32[1,1], index: 0, kind: input, shape index: {}]
  %s1 = inlined_call_operand.hbm [shape: f32[7,16], index: 1, kind: input, shape index: {}]
  %s2 = inlined_call_operand.vmem [shape: s32[1,16], index: 2, kind: input, shape index: {}]
  %s3 = inlined_call_operand.vmem [shape: f32[1,16], index: 3, kind: input, shape index: {}]
  %s4 = inlined_call_operand.hbm [shape: f32[1,1], index: 4, kind: output, shape index: {}]
  %s5 = sld [smem:[#allocation0]]
  $region30: #{tpu_custom_call.1} parent=0
    _
  %s7 = ssub.s32 1, %s5
  %s8 = scalar_select 0, %s7, %s5
  %9 = sst [smem:[#allocation2]] %s0
  $region1: #{tpu_custom_call.1} parent=0
    #allocation3 [shape = 'u8[4096]{0}', space=vmem, size = 0x1000, scoped, tag = 'input window, operand 1, single buffered']
    #allocation4 [shape = 's32[1]{0}', space=sflag, size = 0x4, scoped, tag = 'scoped memory for tpu_custom_call.1']
    #allocation5 [shape = 's32[1]{0}', space=sflag, size = 0x4, scoped, tag = 'scoped memory for tpu_custom_call.1']
    #allocation6 [shape = 'u8[512]{0}', space=smem, size = 0x200, scoped, tag = 'output window, operand 0, single buffered']
    %10 = vsyncpa [#allocation4], 0
    %11 = vsyncpa [#allocation5], 0
    // Predicated region
    $region2: #{tpu_custom_call.1} parent=1 // pred_check
      _
    $region3: #{tpu_custom_call.1} parent=1 // pred_check_branch
      %13 = sbr.rel (0) target = $region5
    $region4: #{tpu_custom_call.1} parent=1 // pred_region
      _
    $region5: #{tpu_custom_call.1} parent=1 // pred_fallthru
      _
    // Predicated region
    $region6: #{tpu_custom_call.1} parent=1 // pred_check
      _
    $region7: #{tpu_custom_call.1} parent=1 // pred_check_branch
      %15 = sbr.rel (0) target = $region9
    $region8: #{tpu_custom_call.1} parent=1 // pred_region
      %17 = vsyncadd [#allocation4], 0
      %s19 = sshll.u32 %s1, 4
      %s20 = int_to_ptr.hbm [resolvable:$true] %s19
      %s21 = sshll.u32 [#allocation3], 4
      %s22 = int_to_ptr.vmem [resolvable:$true] %s21
      %24 = dma.hbm_to_vmem [thread:$0]  %s20, 128, %s22, [#allocation4]
    $region9: #{tpu_custom_call.1} parent=1 // pred_fallthru
      _
    // Predicated region
    $region10: #{tpu_custom_call.1} parent=1 // pred_check
      _
    $region11: #{tpu_custom_call.1} parent=1 // pred_check_branch
      %26 = sbr.rel (0) target = $region13
    $region12: #{tpu_custom_call.1} parent=1 // pred_region
      _
    $region13: #{tpu_custom_call.1} parent=1 // pred_fallthru
      _
    // Predicated region
    $region14: #{tpu_custom_call.1} parent=1 // pred_check
      _
    $region15: #{tpu_custom_call.1} parent=1 // pred_check_branch
      %28 = sbr.rel (0) target = $region17
    $region16: #{tpu_custom_call.1} parent=1 // pred_region
      _
    $region17: #{tpu_custom_call.1} parent=1 // pred_fallthru
      _
    // Predicated region
    $region18: #{tpu_custom_call.1} parent=1 // pred_check
      _
    $region19: #{tpu_custom_call.1} parent=1 // pred_check_branch
      %30 = sbr.rel (0) target = $region21
    $region20: #{tpu_custom_call.1} parent=1 // pred_region
      %32 = dma.done [#allocation4], 128
    $region21: #{tpu_custom_call.1} parent=1 // pred_fallthru
      _
    %v33 = vld [vmem:[#allocation3] sm:$0x7f]
    %v34 = vld [vmem:[%s2] sm:$0x1]
    %v35 = vld [vmem:[%s3] sm:$0x1]
    %vm36 = vcmask 129024
    %v37 = vsel %vm36, %v33, -inf
    %v38 = vrot.slane %v37, 4
    %v39 = vmax.f32 %v37, %v38
    %v40 = vrot.slane %v39, 2
    %v41 = vmax.f32 %v39, %v40
    %v42 = vrot.slane %v41, 1
    %v43 = vmax.f32 %v41, %v42
    %v44 = vsub.f32 %v33, %v43
    %v45 = vmul.f32 %v44, 1.442695
    %v46 = vpow.pop %v45
    %v47 = vsel %vm36, %v46, 0.0
    %v48 = vrot.slane %v47, 4
    %v49 = vadd.f32 %v47, %v48
    %v50 = vrot.slane %v49, 2
    %v51 = vadd.f32 %v49, %v50
    %v52 = vrot.slane %v51, 1
    %v53 = vadd.f32 %v51, %v52
    %v54 = vlog2.pop %v53
    %v55 = vmul.f32 %v54, 0.6931472
    %v56 = vadd.f32 %v43, %v55
    %v57 = vlaneseq
    %v58 = vshrl.u32 %v57, 7
    %v59 = vperm.slane %v34, 0
    %vm60 = vcmp.eq.s32.totalorder %v58, %v59
    %v61 = vsel %vm60, %v33, 0.0
    %v62 = vsel %vm36, %v61, 0.0
    %v63 = vrot.slane %v62, 4
    %v64 = vadd.f32 %v62, %v63
    %v65 = vrot.slane %v64, 2
    %v66 = vadd.f32 %v64, %v65
    %v67 = vrot.slane %v66, 1
    %v68 = vadd.f32 %v66, %v67
    %v69 = vsel %vm60, %v46, 0.0
    %v70 = vsel %vm36, %v69, 0.0
    %v71 = vrot.slane %v70, 4
    %v72 = vadd.f32 %v70, %v71
    %v73 = vrot.slane %v72, 2
    %v74 = vadd.f32 %v72, %v73
    %v75 = vrot.slane %v74, 1
    %v76 = vadd.f32 %v74, %v75
    %v77 = vsub.f32 %v56, %v68
    %v78 = vrcp.pop %v53
    %v79 = vmul.f32 %v53, %v78
    %v80 = vsub.f32 1.0, %v79
    %v81 = vmul.f32 %v78, %v80
    %v82 = vadd.f32 %v78, %v81
    %vm83 = vweird.f32 %v53
    %vm84 = vweird.f32 %v78
    %vm85 = vmor %vm83, %vm84
    %v86 = vsel %vm85, %v78, %v82
    %v87 = vand.u32 2147483647, %v53
    %vm88 = vcmp.eq.f32.partialorder %v87, 8.507059e+37
    %v89 = vand.u32 %v53, 2147483648
    %v90 = vor.u32 1.1754944e-38, %v89
    %v91 = vsel %vm88, %v90, %v86
    %v92 = vmul.f32 %v76, %v91
    %v93 = vsub.f32 1.0, %v92
    %v94 = vmul.f32 %v93, %v93
    %v95 = vmul.f32 %v35, %v94
    %v96 = vmul.f32 %v95, %v77
    %v97 = vsel %vm36, %v33, 0.0
    %v98 = vrot.slane %v97, 4
    %v99 = vadd.f32 %v97, %v98
    %v100 = vrot.slane %v99, 2
    %v101 = vadd.f32 %v99, %v100
    %v102 = vrot.slane %v101, 1
    %v103 = vadd.f32 %v101, %v102
    %v104 = vmul.f32 %v103, 0.14285715
    %v105 = vsub.f32 %v56, %v104
    %v106 = vmul.f32 %v96, 0.9
    %v107 = vmul.f32 %v105, 0.1
    %v108 = vadd.f32 %v106, %v107
    %s109 = smul.u32 0, 16
    %v110 = vlaneseq
    %v111 = vand.u32 %v110, 127
    %v112 = vstv %s109
    %v113 = vadd.s32 %v112, %v111
    %s114 = sld [smem:[#allocation2]]
    %v115 = vstv %s114
    %vm116 = vcmp.lt.s32.totalorder %v113, %v115
    %v117 = vsel %vm116, %v108, 0.0
    %vm118 = vcmask 122880
    %v119 = vsel %vm118, %v117, 0.0
    %120 = vadd.xlane.f32.xlu0 %v119
    %v121 = vpop.xlane.xlu0 %120
    %v122 = vrot.slane %v121, 4
    %v123 = vadd.f32 %v121, %v122
    %v124 = vrot.slane %v123, 2
    %v125 = vadd.f32 %v123, %v124
    %v126 = vrot.slane %v125, 1
    %v127 = vadd.f32 %v125, %v126
    %s128 = vtos %v127
    %s129 = scalar_lea.smem [#allocation6], 0
    %130 = sst [smem:[%s129]] %s128
    // Predicated region
    $region22: #{tpu_custom_call.1} parent=1 // pred_check
      _
    $region23: #{tpu_custom_call.1} parent=1 // pred_check_branch
      %132 = sbr.rel (0) target = $region25
    $region24: #{tpu_custom_call.1} parent=1 // pred_region
      %134 = vsyncadd [#allocation5], 0
      %s136 = sshll.u32 %s4, 4
      %s137 = int_to_ptr.hbm [resolvable:$true] %s136
      %139 = dma.smem_to_hbm [#allocation6], 16, %s137, [#allocation5]
    $region25: #{tpu_custom_call.1} parent=1 // pred_fallthru
      _
    // Predicated region
    $region26: #{tpu_custom_call.1} parent=1 // pred_check
      _
    $region27: #{tpu_custom_call.1} parent=1 // pred_check_branch
      %141 = sbr.rel (0) target = $region29
    $region28: #{tpu_custom_call.1} parent=1 // pred_region
      %143 = dma.done [#allocation5], 16
    $region29: #{tpu_custom_call.1} parent=1 // pred_fallthru
      _
    %144 = sfence
    %145 = vsyncpa [#allocation4], 1
    %146 = vsyncpa [#allocation5], 1

</llo_original>
